<compile_context>
chip_gen: v7x
topology: tpu7x:2x2x1
jax: 0.10.0
libtpu: 0.0.40
codegen_flags: <defaults>
</compile_context>

<pallas_src>
import functools
import math

import jax
import jax.numpy as jnp
from jax.experimental import pallas as pl
from jax.experimental.pallas import tpu as pltpu


def _hash_u32(h):
    """lowbias32-style integer hash, uint32 -> uint32 (good avalanche)."""
    h = (h ^ (h >> 16)) * jnp.uint32(0x7FEB352D)
    h = (h ^ (h >> 15)) * jnp.uint32(0x846CA68B)
    h = h ^ (h >> 16)
    return h


def expert_kernel(seed_ref, x_ref, w1_ref, b1_ref, w2_ref, b2_ref, o_ref,
                  *, p, block_rows, compute_dtype):
    """One batch tile: dropout -> fc1 -> gelu (exact erf) -> fc2."""
    x = x_ref[...].astype(jnp.float32)

    if p > 0.0:
        rows, cols = x.shape
        # Global element index (unique per tile & per core on v7x).
        base = (pl.program_id(0) * block_rows).astype(jnp.uint32)
        row = jax.lax.broadcasted_iota(jnp.uint32, (rows, cols), 0)
        col = jax.lax.broadcasted_iota(jnp.uint32, (rows, cols), 1)
        idx = (base + row) * jnp.uint32(cols) + col
        seed = seed_ref[0].astype(jnp.uint32)
        bits = _hash_u32(idx ^ (seed * jnp.uint32(0x9E3779B9)))
        # Keep with prob (1-p): compare raw uint32 bits against static threshold.
        thresh = jnp.uint32(int(p * (1 << 32)))
        keep = bits >= thresh
        x = jnp.where(keep, x, jnp.float32(0.0)) * jnp.float32(1.0 / (1.0 - p))

    if compute_dtype is not None:
        xd = x.astype(compute_dtype)
        w1 = w1_ref[...].astype(compute_dtype)
    else:
        xd = x
        w1 = w1_ref[...]

    # fc1 (MXU) + exact (erf-based) GELU, matching torch F.gelu default.
    h = jnp.dot(xd, w1, preferred_element_type=jnp.float32) + b1_ref[...]
    h = 0.5 * h * (1.0 + jax.lax.erf(h * (1.0 / math.sqrt(2.0))))

    if compute_dtype is not None:
        hd = h.astype(compute_dtype)
        w2 = w2_ref[...].astype(compute_dtype)
    else:
        hd = h
        w2 = w2_ref[...]

    # fc2 (MXU); output tile is lane-dense (padded to a multiple of 128 cols).
    y = jnp.dot(hd, w2, preferred_element_type=jnp.float32) + b2_ref[...]
    o_ref[...] = y.astype(o_ref.dtype)


def expert_forward(x, w1, b1, w2, b2, *, seed=0, p=0.1, training=True,
                   block_rows=256, compute_dtype=None, vmem_limit_bytes=None):
    """x: (B, in). w1: (in, feat). b1: (1, feat). w2: (feat, out). b2: (1, out)."""
    B, in_size = x.shape
    feat = w1.shape[1]
    out_size = w2.shape[1]

    # ---- lane-dense output: pad N up to a multiple of 128 (sliced off below).
    n_pad = ((out_size + 127) // 128) * 128
    if n_pad != out_size:
        w2p = jnp.zeros((feat, n_pad), w2.dtype).at[:, :out_size].set(w2)
        b2p = jnp.zeros((1, n_pad), b2.dtype).at[:, :out_size].set(b2)
    else:
        w2p, b2p = w2, b2

    # ---- batch tiling: tile rows multiple of 8 (sublane), pad B to tile grid.
    tb = min(block_rows, ((B + 7) // 8) * 8)
    tb = max(8, ((tb + 7) // 8) * 8)
    b_pad = ((B + tb - 1) // tb) * tb
    xp = x if b_pad == B else jnp.zeros((b_pad, in_size), x.dtype).at[:B].set(x)

    grid = (b_pad // tb,)
    p_eff = float(p) if training else 0.0
    kernel = functools.partial(
        expert_kernel, p=p_eff, block_rows=tb, compute_dtype=compute_dtype)

    flops = 2 * b_pad * (in_size * feat + feat * n_pad)
    bytes_accessed = 4 * (b_pad * in_size + in_size * feat + feat
                          + feat * n_pad + n_pad + b_pad * n_pad)

    out = pl.pallas_call(
        kernel,
        out_shape=jax.ShapeDtypeStruct((b_pad, n_pad), x.dtype),
        grid_spec=pltpu.PrefetchScalarGridSpec(
            num_scalar_prefetch=1,            # seed -> SMEM
            grid=grid,
            in_specs=[
                # x: one batch tile per grid step (pipelined)
                pl.BlockSpec((tb, in_size), lambda i, seed_ref: (i, 0)),
                # weights/biases: VMEM-resident, DMA'd once
                pl.BlockSpec((in_size, feat), lambda i, seed_ref: (0, 0)),
                pl.BlockSpec((1, feat), lambda i, seed_ref: (0, 0)),
                pl.BlockSpec((feat, n_pad), lambda i, seed_ref: (0, 0)),
                pl.BlockSpec((1, n_pad), lambda i, seed_ref: (0, 0)),
            ],
            out_specs=pl.BlockSpec((tb, n_pad), lambda i, seed_ref: (i, 0)),
        ),
        compiler_params=pltpu.CompilerParams(
            dimension_semantics=("parallel",),
            vmem_limit_bytes=vmem_limit_bytes,
        ),
        cost_estimate=pl.CostEstimate(
            flops=flops,
            transcendentals=b_pad * feat,     # one erf per fc1 activation
            bytes_accessed=bytes_accessed,
        ),
    )(jnp.array([seed], dtype=jnp.int32), xp, w1, b1, w2p, b2p)

    return out[:B, :out_size]


def init_expert_params(key, input_size, output_size, feature):
    """Deterministic init mimicking torch nn.Linear default (uniform ±1/sqrt(fan_in))."""
    k1, k2, k3, k4 = jax.random.split(key, 4)
    bound1 = 1.0 / math.sqrt(input_size)
    bound2 = 1.0 / math.sqrt(feature)
    w1 = jax.random.uniform(k1, (input_size, feature), jnp.float32, -bound1, bound1)
    b1 = jax.random.uniform(k2, (1, feature), jnp.float32, -bound1, bound1)
    w2 = jax.random.uniform(k3, (feature, output_size), jnp.float32, -bound2, bound2)
    b2 = jax.random.uniform(k4, (1, output_size), jnp.float32, -bound2, bound2)
    return w1, b1, w2, b2


if __name__ == "__main__":
    # Small shapes consistent with the module: (batch, input_size) -> (batch, output_size)
    batch, input_size, output_size, feature = 8, 32, 8, 256

    key = jax.random.PRNGKey(0)
    kx, kp = jax.random.split(key)
    x = jax.random.normal(kx, (batch, input_size), dtype=jnp.float32)
    w1, b1, w2, b2 = init_expert_params(kp, input_size, output_size, feature)

    out = expert_forward(x, w1, b1, w2, b2, seed=0, p=0.1, training=True)
    jax.block_until_ready(out)
    assert out.shape == (batch, output_size) and out.dtype == jnp.float32
    assert bool(jnp.all(jnp.isfinite(out)))

    # Sanity check the eval (no-dropout) path against a pure-JAX reference.
    out_eval = expert_forward(x, w1, b1, w2, b2, p=0.1, training=False)
    ref = jnp.dot(jax.nn.gelu(jnp.dot(x, w1) + b1, approximate=False), w2) + b2
    assert bool(jnp.allclose(out_eval, ref, atol=1e-4, rtol=1e-4))

    print("KERNEL_OK")
</pallas_src>

<mosaic_0001>
module attributes {stable_mosaic.version = 11 : i64} {
  func.func @expert_kernel(%arg0: i32, %arg1: memref<1xi32, #tpu.memory_space<smem>>, %arg2: memref<8x32xf32, #tpu.memory_space<vmem>>, %arg3: memref<32x256xf32, #tpu.memory_space<vmem>>, %arg4: memref<1x256xf32, #tpu.memory_space<vmem>>, %arg5: memref<256x128xf32, #tpu.memory_space<vmem>>, %arg6: memref<1x128xf32, #tpu.memory_space<vmem>>, %arg7: memref<8x128xf32, #tpu.memory_space<vmem>>) attributes {dimension_semantics = [#tpu.dimension_semantics<parallel>], iteration_bounds = array<i64: 1>, scalar_prefetch = 1 : i64, scratch_operands = 0 : i64, tpu.core_type = #tpu.core_type<tc>, window_params = [{transform_indices = @transform_0, window_bounds = array<i64: 8, 32>}, {pipeline_mode = #tpu.pipeline_mode<synchronous>, transform_indices = @transform_1, window_bounds = array<i64: 32, 256>}, {pipeline_mode = #tpu.pipeline_mode<synchronous>, transform_indices = @transform_2, window_bounds = array<i64: 1, 256>}, {pipeline_mode = #tpu.pipeline_mode<synchronous>, transform_indices = @transform_3, window_bounds = array<i64: 256, 128>}, {pipeline_mode = #tpu.pipeline_mode<synchronous>, transform_indices = @transform_4, window_bounds = array<i64: 1, 128>}, {transform_indices = @transform_5, window_bounds = array<i64: 8, 128>}]} {
    %c0 = arith.constant 0 : index
    %c0_0 = arith.constant 0 : index
    %0 = vector.load %arg2[%c0, %c0_0] : memref<8x32xf32, #tpu.memory_space<vmem>>, vector<8x32xf32>
    %c8_i32 = arith.constant 8 : i32
    %1 = arith.muli %arg0, %c8_i32 : i32
    %2 = tpu.iota {dimensions = array<i32: 0>} : vector<8x32xi32>
    %3 = tpu.iota {dimensions = array<i32: 1>} : vector<8x32xi32>
    %4 = vector.broadcast %1 : i32 to vector<8x32xi32>
    %5 = arith.addi %4, %2 : vector<8x32xi32>
    %c32_i32 = arith.constant 32 : i32
    %6 = vector.broadcast %c32_i32 : i32 to vector<8x32xi32>
    %7 = arith.muli %5, %6 : vector<8x32xi32>
    %8 = arith.addi %7, %3 : vector<8x32xi32>
    %c0_1 = arith.constant 0 : index
    %9 = memref.load %arg1[%c0_1] : memref<1xi32, #tpu.memory_space<smem>>
    %c-1640531527_i32 = arith.constant -1640531527 : i32
    %10 = arith.muli %9, %c-1640531527_i32 : i32
    %11 = vector.broadcast %10 : i32 to vector<8x32xi32>
    %12 = arith.xori %8, %11 : vector<8x32xi32>
    %c16_i32 = arith.constant 16 : i32
    %13 = vector.broadcast %c16_i32 : i32 to vector<8x32xi32>
    %14 = arith.shrui %12, %13 : vector<8x32xi32>
    %15 = arith.xori %12, %14 : vector<8x32xi32>
    %c2146121005_i32 = arith.constant 2146121005 : i32
    %16 = vector.broadcast %c2146121005_i32 : i32 to vector<8x32xi32>
    %17 = arith.muli %15, %16 : vector<8x32xi32>
    %c15_i32 = arith.constant 15 : i32
    %18 = vector.broadcast %c15_i32 : i32 to vector<8x32xi32>
    %19 = arith.shrui %17, %18 : vector<8x32xi32>
    %20 = arith.xori %17, %19 : vector<8x32xi32>
    %c-2073254261_i32 = arith.constant -2073254261 : i32
    %21 = vector.broadcast %c-2073254261_i32 : i32 to vector<8x32xi32>
    %22 = arith.muli %20, %21 : vector<8x32xi32>
    %c16_i32_2 = arith.constant 16 : i32
    %23 = vector.broadcast %c16_i32_2 : i32 to vector<8x32xi32>
    %24 = arith.shrui %22, %23 : vector<8x32xi32>
    %25 = arith.xori %22, %24 : vector<8x32xi32>
    %c429496729_i32 = arith.constant 429496729 : i32
    %26 = vector.broadcast %c429496729_i32 : i32 to vector<8x32xi32>
    %27 = arith.cmpi uge, %25, %26 : vector<8x32xi32>
    %cst = arith.constant 0.000000e+00 : f32
    %28 = vector.broadcast %cst : f32 to vector<8x32xf32>
    %29 = arith.select %27, %0, %28 : vector<8x32xi1>, vector<8x32xf32>
    %cst_3 = arith.constant 1.11111116 : f32
    %30 = vector.broadcast %cst_3 : f32 to vector<8x32xf32>
    %31 = arith.mulf %29, %30 : vector<8x32xf32>
    %c0_4 = arith.constant 0 : index
    %c0_5 = arith.constant 0 : index
    %32 = vector.load %arg3[%c0_4, %c0_5] : memref<32x256xf32, #tpu.memory_space<vmem>>, vector<32x256xf32>
    %cst_6 = arith.constant dense<0.000000e+00> : vector<8x256xf32>
    %33 = tpu.matmul %31, %32, %cst_6 {dimension_numbers = #tpu.dot_dimension_numbers<[1], [0], [0], [1], [0, 0, 1, 1], [], []>} : vector<8x32xf32>, vector<32x256xf32>, vector<8x256xf32> -> vector<8x256xf32>
    %c0_7 = arith.constant 0 : index
    %c0_8 = arith.constant 0 : index
    %34 = vector.load %arg4[%c0_7, %c0_8] : memref<1x256xf32, #tpu.memory_space<vmem>>, vector<1x256xf32>
    %35 = vector.broadcast %34 : vector<1x256xf32> to vector<8x256xf32>
    %36 = arith.addf %33, %35 : vector<8x256xf32>
    %cst_9 = arith.constant 5.000000e-01 : f32
    %37 = vector.broadcast %cst_9 : f32 to vector<8x256xf32>
    %38 = arith.mulf %37, %36 : vector<8x256xf32>
    %cst_10 = arith.constant 0.707106769 : f32
    %39 = vector.broadcast %cst_10 : f32 to vector<8x256xf32>
    %40 = arith.mulf %36, %39 : vector<8x256xf32>
    %41 = math.erf %40 : vector<8x256xf32>
    %cst_11 = arith.constant 1.000000e+00 : f32
    %42 = vector.broadcast %cst_11 : f32 to vector<8x256xf32>
    %43 = arith.addf %42, %41 : vector<8x256xf32>
    %44 = arith.mulf %38, %43 : vector<8x256xf32>
    %c0_12 = arith.constant 0 : index
    %c0_13 = arith.constant 0 : index
    %45 = vector.load %arg5[%c0_12, %c0_13] : memref<256x128xf32, #tpu.memory_space<vmem>>, vector<256x128xf32>
    %cst_14 = arith.constant dense<0.000000e+00> : vector<8x128xf32>
    %46 = tpu.matmul %44, %45, %cst_14 {dimension_numbers = #tpu.dot_dimension_numbers<[1], [0], [0], [1], [0, 0, 1, 1], [], []>} : vector<8x256xf32>, vector<256x128xf32>, vector<8x128xf32> -> vector<8x128xf32>
    %c0_15 = arith.constant 0 : index
    %c0_16 = arith.constant 0 : index
    %47 = vector.load %arg6[%c0_15, %c0_16] : memref<1x128xf32, #tpu.memory_space<vmem>>, vector<1x128xf32>
    %48 = vector.broadcast %47 : vector<1x128xf32> to vector<8x128xf32>
    %49 = arith.addf %46, %48 : vector<8x128xf32>
    %c0_17 = arith.constant 0 : index
    %c0_18 = arith.constant 0 : index
    %50 = vector.load %arg7[%c0_17, %c0_18] : memref<8x128xf32, #tpu.memory_space<vmem>>, vector<8x128xf32>
    tpu.vector_store %arg7[%c0_17, %c0_18], %49 {strides = array<i32>} : memref<8x128xf32, #tpu.memory_space<vmem>>, vector<8x128xf32>,
    return
  }
  func.func @transform_0(%arg0: i32, %arg1: memref<1xi32, #tpu.memory_space<smem>>) -> (i32, i32) {
    %c0_i32 = arith.constant 0 : i32
    %c0_i32_0 = arith.constant 0 : i32
    return %arg0, %c0_i32 : i32, i32
  }
  func.func @transform_1(%arg0: i32, %arg1: memref<1xi32, #tpu.memory_space<smem>>) -> (i32, i32) {
    %c0_i32 = arith.constant 0 : i32
    %c0_i32_0 = arith.constant 0 : i32
    %c0_i32_1 = arith.constant 0 : i32
    return %c0_i32, %c0_i32_0 : i32, i32
  }
  func.func @transform_2(%arg0: i32, %arg1: memref<1xi32, #tpu.memory_space<smem>>) -> (i32, i32) {
    %c0_i32 = arith.constant 0 : i32
    %c0_i32_0 = arith.constant 0 : i32
    %c0_i32_1 = arith.constant 0 : i32
    return %c0_i32, %c0_i32_0 : i32, i32
  }
  func.func @transform_3(%arg0: i32, %arg1: memref<1xi32, #tpu.memory_space<smem>>) -> (i32, i32) {
    %c0_i32 = arith.constant 0 : i32
    %c0_i32_0 = arith.constant 0 : i32
    %c0_i32_1 = arith.constant 0 : i32
    return %c0_i32, %c0_i32_0 : i32, i32
  }
  func.func @transform_4(%arg0: i32, %arg1: memref<1xi32, #tpu.memory_space<smem>>) -> (i32, i32) {
    %c0_i32 = arith.constant 0 : i32
    %c0_i32_0 = arith.constant 0 : i32
    %c0_i32_1 = arith.constant 0 : i32
    return %c0_i32, %c0_i32_0 : i32, i32
  }
  func.func @transform_5(%arg0: i32, %arg1: memref<1xi32, #tpu.memory_space<smem>>) -> (i32, i32) {
    %c0_i32 = arith.constant 0 : i32
    %c0_i32_0 = arith.constant 0 : i32
    return %arg0, %c0_i32 : i32, i32
  }
}

</mosaic_0001>

<llo_original>
// kernel: tpu_custom_call.1
$region0: #{tpu_custom_call.1}
  #allocation0 [shape = 'u32[]', space=smem, size = 0x4, offset = 0x4, fixed_abs, tag = 'smem constant byte address 0x4 - core index']
  #allocation1 [shape = 'u32[144,128]{1,0:T(1,128)}', space=vmem, size = 0x12000, scoped, tag = 'internal scratch']
  #allocation2 [shape = 's32[1]{0}', space=sflag, size = 0x4, scoped, tag = 'scoped memory for tpu_custom_call.1']
  #allocation3 [shape = 's32[1]{0:T(128)S(6)}', space=smem, size = 0x200, scoped, tag = 'prefetched SMEM operand 0']
  %s0 = inlined_call_operand.<no memory space> [shape: s32[1], index: 0, kind: input, shape index: {}]
  %s1 = inlined_call_operand.hbm [shape: f32[8,32], index: 1, kind: input, shape index: {}]
  %s2 = inlined_call_operand.hbm [shape: f32[32,256], index: 2, kind: input, shape index: {}]
  %s3 = inlined_call_operand.vmem [shape: f32[1,256], index: 3, kind: input, shape index: {}]
  %s4 = inlined_call_operand.hbm [shape: f32[256,128], index: 4, kind: input, shape index: {}]
  %s5 = inlined_call_operand.vmem [shape: f32[1,128], index: 5, kind: input, shape index: {}]
  %s6 = inlined_call_operand.hbm [shape: f32[8,128], index: 6, kind: output, shape index: {}]
  %s7 = sld [smem:[#allocation0]]
  $region42: #{tpu_custom_call.1} parent=0
    _
  %s9 = ssub.s32 1, %s7
  %s10 = scalar_select 0, %s9, %s7
  %11 = sst [smem:[#allocation3]] %s0
  $region1: #{tpu_custom_call.1} parent=0
    #allocation4 [shape = 'u8[4096]{0}', space=vmem, size = 0x1000, scoped, tag = 'input window, operand 1, single buffered']
    #allocation5 [shape = 's32[1]{0}', space=sflag, size = 0x4, scoped, tag = 'scoped memory for tpu_custom_call.1']
    #allocation6 [shape = 's32[1]{0}', space=sflag, size = 0x4, scoped, tag = 'scoped memory for tpu_custom_call.1']
    #allocation7 [shape = 'u8[32768]{0}', space=vmem, size = 0x8000, scoped, tag = 'input window, operand 2, single buffered']
    #allocation8 [shape = 's32[1]{0}', space=sflag, size = 0x4, scoped, tag = 'scoped memory for tpu_custom_call.1']
    #allocation9 [shape = 'u8[131072]{0}', space=vmem, size = 0x20000, scoped, tag = 'input window, operand 4, single buffered']
    #allocation10 [shape = 'u8[4096]{0}', space=vmem, size = 0x1000, scoped, tag = 'output window, operand 0, single buffered']
    %12 = vsyncpa [#allocation5], 0
    %13 = vsyncpa [#allocation8], 0
    %14 = vsyncpa [#allocation6], 0
    // Predicated region
    $region2: #{tpu_custom_call.1} parent=1 // pred_check
      _
    $region3: #{tpu_custom_call.1} parent=1 // pred_check_branch
      %16 = sbr.rel (0) target = $region5
    $region4: #{tpu_custom_call.1} parent=1 // pred_region
      %s18 = ssub.s32 128, 128
      %19 = vsyncadd [#allocation5], %s18
      %s21 = sshll.u32 [#allocation4], 4
      %s22 = int_to_ptr.vmem [resolvable:$true] %s21
      %24 = dma.hbm_to_vmem [thread:$0]  %s1, 128, %s22, [#allocation5]
    $region5: #{tpu_custom_call.1} parent=1 // pred_fallthru
      _
    // Predicated region
    $region6: #{tpu_custom_call.1} parent=1 // pred_check
      _
    $region7: #{tpu_custom_call.1} parent=1 // pred_check_branch
      %26 = sbr.rel (0) target = $region9
    $region8: #{tpu_custom_call.1} parent=1 // pred_region
      %s28 = ssub.s32 1024, 1024
      %29 = vsyncadd [#allocation8], %s28
      %s30 = sshll.u32 [#allocation7], 4
      %s31 = int_to_ptr.vmem [resolvable:$true] %s30
      %36 = dma.hbm_to_vmem [thread:$0]  %s2, 1024, %s31, [#allocation8], 256, 256, 16
    $region9: #{tpu_custom_call.1} parent=1 // pred_fallthru
      _
    // Predicated region
    $region10: #{tpu_custom_call.1} parent=1 // pred_check
      _
    $region11: #{tpu_custom_call.1} parent=1 // pred_check_branch
      %38 = sbr.rel (0) target = $region13
    $region12: #{tpu_custom_call.1} parent=1 // pred_region
      _
    $region13: #{tpu_custom_call.1} parent=1 // pred_fallthru
      _
    // Predicated region
    $region14: #{tpu_custom_call.1} parent=1 // pred_check
      _
    $region15: #{tpu_custom_call.1} parent=1 // pred_check_branch
      %40 = sbr.rel (0) target = $region17
    $region16: #{tpu_custom_call.1} parent=1 // pred_region
      %s42 = ssub.s32 4096, 4096
      %43 = vsyncadd [#allocation8], %s42
      %s44 = sshll.u32 [#allocation9], 4
      %s45 = int_to_ptr.vmem [resolvable:$true] %s44
      %50 = dma.hbm_to_vmem [thread:$0]  %s4, 4096, %s45, [#allocation8], 128, 128, 8
    $region17: #{tpu_custom_call.1} parent=1 // pred_fallthru
      _
    // Predicated region
    $region18: #{tpu_custom_call.1} parent=1 // pred_check
      _
    $region19: #{tpu_custom_call.1} parent=1 // pred_check_branch
      %52 = sbr.rel (0) target = $region21
    $region20: #{tpu_custom_call.1} parent=1 // pred_region
      _
    $region21: #{tpu_custom_call.1} parent=1 // pred_fallthru
      _
    // Predicated region
    $region22: #{tpu_custom_call.1} parent=1 // pred_check
      _
    $region23: #{tpu_custom_call.1} parent=1 // pred_check_branch
      %54 = sbr.rel (0) target = $region25
    $region24: #{tpu_custom_call.1} parent=1 // pred_region
      %55 = dma.done [#allocation5], 128
    $region25: #{tpu_custom_call.1} parent=1 // pred_fallthru
      _
    // Predicated region
    $region26: #{tpu_custom_call.1} parent=1 // pred_check
      _
    $region27: #{tpu_custom_call.1} parent=1 // pred_check_branch
      %57 = sbr.rel (0) target = $region29
    $region28: #{tpu_custom_call.1} parent=1 // pred_region
      %58 = dma.done [#allocation8], 1024
    $region29: #{tpu_custom_call.1} parent=1 // pred_fallthru
      _
    // Predicated region
    $region30: #{tpu_custom_call.1} parent=1 // pred_check
      _
    $region31: #{tpu_custom_call.1} parent=1 // pred_check_branch
      %60 = sbr.rel (0) target = $region33
    $region32: #{tpu_custom_call.1} parent=1 // pred_region
      %61 = dma.done [#allocation8], 4096
    $region33: #{tpu_custom_call.1} parent=1 // pred_fallthru
      _
    %v62 = vld [vmem:[#allocation4] sm:$0xff]
    %s63 = smul.u32 0, 8
    %v64 = vlaneseq
    %v65 = vshrl.u32 %v64, 7
    %v66 = vlaneseq
    %v67 = vand.u32 %v66, 127
    %v68 = vstv %s63
    %v69 = vadd.s32 %v68, %v65
    %v70 = vmul.u32 %v69, 32
    %v71 = vadd.s32 %v70, %v67
    %s72 = sld [smem:[#allocation3]]
    %s73 = smul.u32 %s72, 2654435769
    %v74 = vstv %s73
    %v75 = vxor.u32 %v71, %v74
    %v76 = vshrl.u32 %v75, 16
    %v77 = vxor.u32 %v75, %v76
    %v78 = vmul.u32 %v77, 2146121005
    %v79 = vshrl.u32 %v78, 15
    %v80 = vxor.u32 %v78, %v79
    %v81 = vmul.u32 %v80, 2221713035
    %v82 = vshrl.u32 %v81, 16
    %v83 = vxor.u32 %v81, %v82
    %vm84 = vcmp.ge.u32.totalorder %v83, 429496729
    %v85 = vsel %vm84, %v62, 0.0
    %v86 = vmul.f32 %v85, 1.1111112
    %v87 = vld [vmem:[#allocation7] sm:$0xff]
    %v88 = vld [vmem:[#allocation7 + $0x8] sm:$0xff]
    %v89 = vld [vmem:[#allocation7 + $0x10] sm:$0xff]
    %v90 = vld [vmem:[#allocation7 + $0x18] sm:$0xff]
    %v91 = vld [vmem:[#allocation7 + $0x20] sm:$0xff]
    %v92 = vld [vmem:[#allocation7 + $0x28] sm:$0xff]
    %v93 = vld [vmem:[#allocation7 + $0x30] sm:$0xff]
    %v94 = vld [vmem:[#allocation7 + $0x38] sm:$0xff]
    %v95 = vld [vmem:[%s3] sm:$0x3]
    %v97 = vlaneseq
    %v98 = vshrl.u32 %v97, 7
    %v99 = vsub.s32 0, %v98
    %v100 = vrot.slane %v95, %v99
    %v101 = vlaneseq
    %v102 = vshrl.u32 %v101, 7
    %v103 = vsub.s32 1, %v102
    %v104 = vrot.slane %v95, %v103
    %vm107 = vcmask 261120
    %v109 = vsel %vm107, %v86, 0
    %111 = vmatprep.subr.mxu0 %v88
    %112 = vmatpush1.msra.mxu0 %v87
    %113 = vmatprep.subr.mxu0 %v90
    %114 = vmatpush1.msra.mxu0 %v89
    %115 = vmatprep.subr.mxu0 %v92
    %116 = vmatpush1.msra.mxu0 %v91
    %117 = vmatprep.subr.mxu0 %v94
    %118 = vmatpush1.msra.mxu0 %v93
    %119 = vmatprep.subr.mxu0 0.0
    %120 = vmatpush1.msra.mxu0 0.0
    %121 = vmatprep.subr.mxu0 0.0
    %122 = vmatpush1.msra.mxu0 0.0
    %123 = vmatprep.subr.mxu0 0.0
    %124 = vmatpush1.msra.mxu0 0.0
    %125 = vmatprep.subr.mxu0 0.0
    %126 = vmatpush1.msra.mxu0 0.0
    %127 = vmatprep.subr.mxu0 0.0
    %128 = vmatpush1.msra.mxu0 0.0
    %129 = vmatprep.subr.mxu0 0.0
    %130 = vmatpush1.msra.mxu0 0.0
    %131 = vmatprep.subr.mxu0 0.0
    %132 = vmatpush1.msra.mxu0 0.0
    %133 = vmatprep.subr.mxu0 0.0
    %134 = vmatpush1.msra.mxu0 0.0
    %135 = vmatprep.subr.mxu0 0.0
    %136 = vmatpush1.msra.mxu0 0.0
    %137 = vmatprep.subr.mxu0 0.0
    %138 = vmatpush1.msra.mxu0 0.0
    %139 = vmatprep.subr.mxu0 0.0
    %140 = vmatpush1.msra.mxu0 0.0
    %141 = vmatprep.subr.mxu0 0.0
    %142 = vmatpush1.msra.mxu0 0.0
    %143 = vmatprep.subr.mxu0 0.0
    %144 = vmatpush1.msra.mxu0 0.0
    %145 = vmatprep.subr.mxu0 0.0
    %146 = vmatpush1.msra.mxu0 0.0
    %147 = vmatprep.subr.mxu0 0.0
    %148 = vmatpush1.msra.mxu0 0.0
    %149 = vmatprep.subr.mxu0 0.0
    %150 = vmatpush1.msra.mxu0 0.0
    %151 = vmatprep.subr.mxu0 0.0
    %152 = vmatpush1.msra.mxu0 0.0
    %153 = vmatprep.subr.mxu0 0.0
    %154 = vmatpush1.msra.mxu0 0.0
    %155 = vmatprep.subr.mxu0 0.0
    %156 = vmatpush1.msra.mxu0 0.0
    %157 = vmatprep.subr.mxu0 0.0
    %158 = vmatpush1.msra.mxu0 0.0
    %159 = vmatprep.subr.mxu0 0.0
    %160 = vmatpush1.msra.mxu0 0.0
    %161 = vmatprep.subr.mxu0 0.0
    %162 = vmatpush1.msra.mxu0 0.0
    %163 = vmatprep.subr.mxu0 0.0
    %164 = vmatpush1.msra.mxu0 0.0
    %165 = vmatprep.subr.mxu0 0.0
    %166 = vmatpush1.msra.mxu0 0.0
    %167 = vmatprep.subr.mxu0 0.0
    %168 = vmatpush1.msra.mxu0 0.0
    %169 = vmatprep.subr.mxu0 0.0
    %170 = vmatpush1.msra.mxu0 0.0
    %171 = vmatprep.subr.mxu0 0.0
    %172 = vmatpush1.msra.mxu0 0.0
    %173 = vmatprep.subr.mxu0 0.0
    %174 = vmatpush1.msra.mxu0 0.0
    %175 = vmatprep.mubr.f32.mxu0 0.0
    %176 = vmatmul.mubr.f32.gmra.mrb[0].mxu0 %v109
    %v177 = vpop.f32.mrb[0].mxu0
    %v178 = vadd.f32 %v100, %v177
    %v179 = vpop.f32.mrb[0].mxu0
    %v180 = vadd.f32 %v104, %v179
    %181 = vdwg.mxu0
    %v182 = vmul.f32 %v178, 0.5
    %v183 = vmul.f32 %v180, 0.5
    %v184 = vmul.f32 %v178, 0.70710677
    %v185 = vmul.f32 %v180, 0.70710677
    %v186 = verf.f32.pop %v184
    %v187 = verf.f32.pop %v185
    %v188 = vadd.f32 %v186, 1.0
    %v189 = vadd.f32 %v187, 1.0
    %v190 = vmul.f32 %v182, %v188
    %v191 = vmul.f32 %v183, %v189
    %v192 = vld [vmem:[#allocation9] sm:$0xff]
    %v193 = vld [vmem:[#allocation9 + $0x8] sm:$0xff]
    %v194 = vld [vmem:[#allocation9 + $0x10] sm:$0xff]
    %v195 = vld [vmem:[#allocation9 + $0x18] sm:$0xff]
    %v196 = vld [vmem:[#allocation9 + $0x20] sm:$0xff]
    %v197 = vld [vmem:[#allocation9 + $0x28] sm:$0xff]
    %v198 = vld [vmem:[#allocation9 + $0x30] sm:$0xff]
    %v199 = vld [vmem:[#allocation9 + $0x38] sm:$0xff]
    %v200 = vld [vmem:[#allocation9 + $0x40] sm:$0xff]
    %v201 = vld [vmem:[#allocation9 + $0x48] sm:$0xff]
    %v202 = vld [vmem:[#allocation9 + $0x50] sm:$0xff]
    %v203 = vld [vmem:[#allocation9 + $0x58] sm:$0xff]
    %v204 = vld [vmem:[#allocation9 + $0x60] sm:$0xff]
    %v205 = vld [vmem:[#allocation9 + $0x68] sm:$0xff]
    %v206 = vld [vmem:[#allocation9 + $0x70] sm:$0xff]
    %v207 = vld [vmem:[#allocation9 + $0x78] sm:$0xff]
    %v208 = vld [vmem:[#allocation9 + $0x80] sm:$0xff]
    %v209 = vld [vmem:[#allocation9 + $0x88] sm:$0xff]
    %v210 = vld [vmem:[#allocation9 + $0x90] sm:$0xff]
    %v211 = vld [vmem:[#allocation9 + $0x98] sm:$0xff]
    %v212 = vld [vmem:[#allocation9 + $0xa0] sm:$0xff]
    %v213 = vld [vmem:[#allocation9 + $0xa8] sm:$0xff]
    %v214 = vld [vmem:[#allocation9 + $0xb0] sm:$0xff]
    %v215 = vld [vmem:[#allocation9 + $0xb8] sm:$0xff]
    %v216 = vld [vmem:[#allocation9 + $0xc0] sm:$0xff]
    %v217 = vld [vmem:[#allocation9 + $0xc8] sm:$0xff]
    %v218 = vld [vmem:[#allocation9 + $0xd0] sm:$0xff]
    %v219 = vld [vmem:[#allocation9 + $0xd8] sm:$0xff]
    %v220 = vld [vmem:[#allocation9 + $0xe0] sm:$0xff]
    %v221 = vld [vmem:[#allocation9 + $0xe8] sm:$0xff]
    %v222 = vld [vmem:[#allocation9 + $0xf0] sm:$0xff]
    %v223 = vld [vmem:[#allocation9 + $0xf8] sm:$0xff]
    %v224 = vld [vmem:[%s5] sm:$0x1]
    %v226 = vlaneseq
    %v227 = vshrl.u32 %v226, 7
    %v228 = vsub.s32 0, %v227
    %v229 = vrot.slane %v224, %v228
    %231 = vmatprep.subr.mxu0 0.0
    %232 = vmatpush1.msra.mxu0 %v192
    %233 = vmatprep.subr.mxu0 0.0
    %234 = vmatpush1.msra.mxu0 %v193
    %235 = vmatprep.subr.mxu0 0.0
    %236 = vmatpush1.msra.mxu0 %v194
    %237 = vmatprep.subr.mxu0 0.0
    %238 = vmatpush1.msra.mxu0 %v195
    %239 = vmatprep.subr.mxu0 0.0
    %240 = vmatpush1.msra.mxu0 %v196
    %241 = vmatprep.subr.mxu0 0.0
    %242 = vmatpush1.msra.mxu0 %v197
    %243 = vmatprep.subr.mxu0 0.0
    %244 = vmatpush1.msra.mxu0 %v198
    %245 = vmatprep.subr.mxu0 0.0
    %246 = vmatpush1.msra.mxu0 %v199
    %247 = vmatprep.subr.mxu0 0.0
    %248 = vmatpush1.msra.mxu0 %v200
    %249 = vmatprep.subr.mxu0 0.0
    %250 = vmatpush1.msra.mxu0 %v201
    %251 = vmatprep.subr.mxu0 0.0
    %252 = vmatpush1.msra.mxu0 %v202
    %253 = vmatprep.subr.mxu0 0.0
    %254 = vmatpush1.msra.mxu0 %v203
    %255 = vmatprep.subr.mxu0 0.0
    %256 = vmatpush1.msra.mxu0 %v204
    %257 = vmatprep.subr.mxu0 0.0
    %258 = vmatpush1.msra.mxu0 %v205
    %259 = vmatprep.subr.mxu0 0.0
    %260 = vmatpush1.msra.mxu0 %v206
    %261 = vmatprep.subr.mxu0 0.0
    %262 = vmatpush1.msra.mxu0 %v207
    %263 = vmatprep.subr.mxu0 0.0
    %264 = vmatpush1.msra.mxu0 %v208
    %265 = vmatprep.subr.mxu0 0.0
    %266 = vmatpush1.msra.mxu0 %v209
    %267 = vmatprep.subr.mxu0 0.0
    %268 = vmatpush1.msra.mxu0 %v210
    %269 = vmatprep.subr.mxu0 0.0
    %270 = vmatpush1.msra.mxu0 %v211
    %271 = vmatprep.subr.mxu0 0.0
    %272 = vmatpush1.msra.mxu0 %v212
    %273 = vmatprep.subr.mxu0 0.0
    %274 = vmatpush1.msra.mxu0 %v213
    %275 = vmatprep.subr.mxu0 0.0
    %276 = vmatpush1.msra.mxu0 %v214
    %277 = vmatprep.subr.mxu0 0.0
    %278 = vmatpush1.msra.mxu0 %v215
    %279 = vmatprep.subr.mxu0 0.0
    %280 = vmatpush1.msra.mxu0 %v216
    %281 = vmatprep.subr.mxu0 0.0
    %282 = vmatpush1.msra.mxu0 %v217
    %283 = vmatprep.subr.mxu0 0.0
    %284 = vmatpush1.msra.mxu0 %v218
    %285 = vmatprep.subr.mxu0 0.0
    %286 = vmatpush1.msra.mxu0 %v219
    %287 = vmatprep.subr.mxu0 0.0
    %288 = vmatpush1.msra.mxu0 %v220
    %289 = vmatprep.subr.mxu0 0.0
    %290 = vmatpush1.msra.mxu0 %v221
    %291 = vmatprep.subr.mxu0 0.0
    %292 = vmatpush1.msra.mxu0 %v222
    %293 = vmatprep.subr.mxu0 0.0
    %294 = vmatpush1.msra.mxu0 %v223
    %295 = vmatprep.mubr.f32.mxu0 %v191
    %296 = vmatmul.mubr.f32.gmra.mrb[0].mxu0 %v190
    %v297 = vpop.f32.mrb[0].mxu0
    %v298 = vadd.f32 %v229, %v297
    %v299 = vpop.f32.mrb[0].mxu0
    %300 = vdwg.mxu0
    %301 = vst [vmem:[#allocation10] sm:$0xff] %v298
    // Predicated region
    $region34: #{tpu_custom_call.1} parent=1 // pred_check
      _
    $region35: #{tpu_custom_call.1} parent=1 // pred_check_branch
      %303 = sbr.rel (0) target = $region37
    $region36: #{tpu_custom_call.1} parent=1 // pred_region
      %s305 = ssub.s32 128, 128
      %306 = vsyncadd [#allocation6], %s305
      %s308 = sshll.u32 [#allocation10], 4
      %s309 = int_to_ptr.vmem [resolvable:$true] %s308
      %311 = dma.vmem_to_hbm [thread:$0]  %s309, 128, %s6, [#allocation6]
    $region37: #{tpu_custom_call.1} parent=1 // pred_fallthru
      _
    // Predicated region
    $region38: #{tpu_custom_call.1} parent=1 // pred_check
      _
    $region39: #{tpu_custom_call.1} parent=1 // pred_check_branch
      %313 = sbr.rel (0) target = $region41
    $region40: #{tpu_custom_call.1} parent=1 // pred_region
      %314 = dma.done [#allocation6], 128
    $region41: #{tpu_custom_call.1} parent=1 // pred_fallthru
      _
    %315 = vsyncpa [#allocation5], 1
    %316 = vsyncpa [#allocation8], 1
    %317 = vsyncpa [#allocation6], 1

</llo_original>
